<compile_context>
chip_gen: v6e
topology: v6e:2x2x1
jax: 0.10.0
libtpu: 0.0.40
codegen_flags: <defaults>
</compile_context>

<pallas_src>
import functools

import jax
import jax.numpy as jnp
import numpy as np
from jax import lax
from jax.experimental import pallas as pl
from jax.experimental.pallas import tpu as pltpu

EPS = 1e-8
_LANE = 128
_TD_TARGET_BYTES = 2 * 1024 * 1024  # ~2 MiB per input tile per grid step


def _round_up(x: int, m: int) -> int:
    return ((x + m - 1) // m) * m


def _cdiv(a: int, b: int) -> int:
    return (a + b - 1) // b


def _corr_loss_kernel(p_ref, t_ref, o_ref,
                      sp_ref, st_ref, spp_ref, stt_ref, spt_ref,
                      *, true_d: int, eps: float, unroll: int):
    k = pl.program_id(1)
    nk = pl.num_programs(1)
    tb, td = p_ref.shape
    n_chunks = td // _LANE

    @pl.when(k == 0)
    def _init():
        zeros = jnp.zeros((tb, _LANE), jnp.float32)
        sp_ref[...] = zeros
        st_ref[...] = zeros
        spp_ref[...] = zeros
        stt_ref[...] = zeros
        spt_ref[...] = zeros

    def accumulate(load_chunk):
        # Streaming raw-moment accumulation; lane (XLU) reduction deferred to
        # the single finalize step.  Carries live in vregs; refs updated once.
        zeros = jnp.zeros((tb, _LANE), jnp.float32)

        def body(c, carry):
            sp, st, spp, stt, spt = carry
            pc, tc = load_chunk(c)
            return (sp + pc, st + tc,
                    spp + pc * pc, stt + tc * tc, spt + pc * tc)

        sp, st, spp, stt, spt = lax.fori_loop(
            0, n_chunks, body, (zeros,) * 5, unroll=unroll)
        sp_ref[...] += sp
        st_ref[...] += st
        spp_ref[...] += spp
        stt_ref[...] += stt
        spt_ref[...] += spt

    # Number of columns of this k-tile that hold real (non-overhang) data.
    valid = jnp.int32(true_d) - k * jnp.int32(td)

    @pl.when(valid >= td)
    def _full_tile():
        def load(c):
            off = pl.multiple_of(c * _LANE, _LANE)
            pc = p_ref[:, pl.ds(off, _LANE)].astype(jnp.float32)
            tc = t_ref[:, pl.ds(off, _LANE)].astype(jnp.float32)
            return pc, tc
        accumulate(load)

    @pl.when(valid < td)
    def _ragged_tile():
        # Last k-tile overhangs the (un-padded) array: zero every lane whose
        # global column index is >= true_d before it touches the moments.
        lane = lax.broadcasted_iota(jnp.int32, (tb, _LANE), 1)

        def load(c):
            off = pl.multiple_of(c * _LANE, _LANE)
            m = lane < (valid - c * _LANE)
            pc = jnp.where(m, p_ref[:, pl.ds(off, _LANE)].astype(jnp.float32), 0.0)
            tc = jnp.where(m, t_ref[:, pl.ds(off, _LANE)].astype(jnp.float32), 0.0)
            return pc, tc
        accumulate(load)

    @pl.when(k == nk - 1)
    def _finalize():
        inv_d = jnp.float32(1.0 / true_d)
        sum_p = jnp.sum(sp_ref[...], axis=1, keepdims=True)    # (TB, 1)
        sum_t = jnp.sum(st_ref[...], axis=1, keepdims=True)
        sum_pp = jnp.sum(spp_ref[...], axis=1, keepdims=True)
        sum_tt = jnp.sum(stt_ref[...], axis=1, keepdims=True)
        sum_pt = jnp.sum(spt_ref[...], axis=1, keepdims=True)

        num = sum_pt - sum_p * sum_t * inv_d
        pp = jnp.maximum(sum_pp - sum_p * sum_p * inv_d, 0.0)
        tt = jnp.maximum(sum_tt - sum_t * sum_t * inv_d, 0.0)
        denom = jnp.sqrt(pp * tt) + jnp.float32(eps)
        # Output block is resident across the k axis; written once here and
        # flushed to HBM when the B-tile changes.
        o_ref[...] = 1.0 - num / denom                           # (TB, 1)


def correlation_loss(pred: jax.Array, target: jax.Array, eps: float = EPS,
                     *, td_target_bytes: int = _TD_TARGET_BYTES) -> jax.Array:
    """pred, target: (B, 2, NBPMS, NTURNS) (f32 or bf16). Returns f32 scalar."""
    B = pred.shape[0]
    p2 = pred.reshape(B, -1)     # no-copy reshape
    t2 = target.reshape(B, -1)
    D = p2.shape[1]
    assert t2.shape == p2.shape

    itemsize = jnp.dtype(p2.dtype).itemsize
    sublane = {4: 8, 2: 16, 1: 32}.get(itemsize, 8)
    # One sublane group per batch tile; if B is smaller, a block equal to the
    # full batch dim is a legal layout.  Keeping TB minimal keeps >=2 batch
    # tiles for v7x megacore whenever B >= 2*sublane.
    TB = sublane if B >= sublane else B
    GB = _cdiv(B, TB)
    B_out = GB * TB              # output rows beyond B are garbage, sliced off

    # Adaptive D tile: split round_up(D,128) into ~equal 128-multiple tiles,
    # each moving ~td_target_bytes per input per step.  No array padding.
    D128 = _round_up(D, _LANE)
    td_target = max(_LANE, (td_target_bytes // (TB * itemsize)) // _LANE * _LANE)
    n_split = _cdiv(D128, td_target)
    TD = _round_up(_cdiv(D128, n_split), _LANE)
    NK = _cdiv(D, TD)

    unroll = max(1, min(8, TD // _LANE))
    kern = functools.partial(_corr_loss_kernel, true_d=D, eps=eps, unroll=unroll)

    per_row = pl.pallas_call(
        kern,
        out_shape=jax.ShapeDtypeStruct((B_out, 1), jnp.float32),
        grid_spec=pltpu.PrefetchScalarGridSpec(
            num_scalar_prefetch=0,
            grid=(GB, NK),
            in_specs=[
                pl.BlockSpec((TB, TD), lambda i, k: (i, k)),
                pl.BlockSpec((TB, TD), lambda i, k: (i, k)),
            ],
            out_specs=pl.BlockSpec((TB, 1), lambda i, k: (i, 0)),
            scratch_shapes=[pltpu.VMEM((TB, _LANE), jnp.float32)] * 5,
        ),
        compiler_params=pltpu.CompilerParams(
            dimension_semantics=("parallel", "arbitrary"),
            vmem_limit_bytes=32 * 1024 * 1024,
        ),
    )(p2, t2)

    return jnp.mean(per_row[:B, 0])


def correlation_loss_ref(pred, target, eps: float = EPS):
    B = pred.shape[0]
    p = pred.reshape(B, -1).astype(jnp.float32)
    t = target.reshape(B, -1).astype(jnp.float32)
    pc = p - p.mean(axis=1, keepdims=True)
    tc = t - t.mean(axis=1, keepdims=True)
    num = jnp.sum(pc * tc, axis=1)
    den = jnp.sqrt(jnp.sum(pc ** 2, axis=1) * jnp.sum(tc ** 2, axis=1)) + eps
    return jnp.mean(1.0 - num / den)


if __name__ == "__main__":
    key = jax.random.PRNGKey(0)
    k1, k2, k3, k4, k5, k6 = jax.random.split(key, 6)
    C = 2

    # 1) Small spec-consistent shape: (B, 2, NBPMS, NTURNS), D = 256.
    B, NBPMS, NTURNS = 2, 8, 16
    pred = jax.random.normal(k1, (B, C, NBPMS, NTURNS), dtype=jnp.float32)
    target = jax.random.normal(k2, (B, C, NBPMS, NTURNS), dtype=jnp.float32)
    loss = correlation_loss(pred, target)
    jax.block_until_ready(loss)
    ref = correlation_loss_ref(pred, target)
    np.testing.assert_allclose(np.asarray(loss), np.asarray(ref),
                               rtol=2e-4, atol=1e-5)

    # 2) Correlated signals, D = 9600, B < sublane (full-dim batch block).
    B2, NBPMS2, NTURNS2 = 3, 96, 50
    pred2 = jax.random.normal(k3, (B2, C, NBPMS2, NTURNS2), dtype=jnp.float32)
    target2 = 0.5 * pred2 + 0.3 * jax.random.normal(
        k4, (B2, C, NBPMS2, NTURNS2), dtype=jnp.float32)
    loss2 = correlation_loss(pred2, target2)
    jax.block_until_ready(loss2)
    ref2 = correlation_loss_ref(pred2, target2)
    np.testing.assert_allclose(np.asarray(loss2), np.asarray(ref2),
                               rtol=2e-4, atol=1e-5)

    # 3) Ragged everything: B=10 (B-tile overhang), D=720 (not a multiple of
    #    TD and > one forced-small tile) -> exercises the un-padded OOB blocks
    #    and the in-kernel masked tail path across 3 k-tiles.
    B3, NBPMS3, NTURNS3 = 10, 9, 40
    pred3 = jax.random.normal(k5, (B3, C, NBPMS3, NTURNS3), dtype=jnp.float32)
    target3 = 0.7 * pred3 + 0.2 * jax.random.normal(
        k6, (B3, C, NBPMS3, NTURNS3), dtype=jnp.float32)
    loss3 = correlation_loss(pred3, target3, td_target_bytes=8 * 1024)
    jax.block_until_ready(loss3)
    ref3 = correlation_loss_ref(pred3, target3)
    np.testing.assert_allclose(np.asarray(loss3), np.asarray(ref3),
                               rtol=2e-4, atol=1e-5)

    print("KERNEL_OK")
</pallas_src>

<mosaic_0001>
module attributes {stable_mosaic.version = 11 : i64} {
  func.func @_corr_loss_kernel(%arg0: i32, %arg1: i32, %arg2: memref<2x256xf32, #tpu.memory_space<vmem>>, %arg3: memref<2x256xf32, #tpu.memory_space<vmem>>, %arg4: memref<2x1xf32, #tpu.memory_space<vmem>>, %arg5: memref<2x128xf32, #tpu.memory_space<vmem>>, %arg6: memref<2x128xf32, #tpu.memory_space<vmem>>, %arg7: memref<2x128xf32, #tpu.memory_space<vmem>>, %arg8: memref<2x128xf32, #tpu.memory_space<vmem>>, %arg9: memref<2x128xf32, #tpu.memory_space<vmem>>) attributes {dimension_semantics = [#tpu.dimension_semantics<parallel>, #tpu.dimension_semantics<arbitrary>], iteration_bounds = array<i64: 1, 1>, scalar_prefetch = 0 : i64, scratch_operands = 5 : i64, tpu.core_type = #tpu.core_type<tc>, window_params = [{transform_indices = @transform_0, window_bounds = array<i64: 2, 256>}, {transform_indices = @transform_1, window_bounds = array<i64: 2, 256>}, {transform_indices = @transform_2, window_bounds = array<i64: 2, 1>}]} {
    %c0_i32 = arith.constant 0 : i32
    %0 = arith.cmpi eq, %arg1, %c0_i32 : i32
    %1 = arith.extui %0 : i1 to i32
    %c0_i32_0 = arith.constant 0 : i32
    %2 = arith.cmpi ne, %1, %c0_i32_0 : i32
    scf.if %2 {
      %cst = arith.constant 0.000000e+00 : f32
      %14 = vector.broadcast %cst : f32 to vector<2x128xf32>
      %c0 = arith.constant 0 : index
      %c0_8 = arith.constant 0 : index
      %15 = vector.load %arg5[%c0, %c0_8] : memref<2x128xf32, #tpu.memory_space<vmem>>, vector<2x128xf32>
      tpu.vector_store %arg5[%c0, %c0_8], %14 {strides = array<i32>} : memref<2x128xf32, #tpu.memory_space<vmem>>, vector<2x128xf32>,
      %c0_9 = arith.constant 0 : index
      %c0_10 = arith.constant 0 : index
      %16 = vector.load %arg6[%c0_9, %c0_10] : memref<2x128xf32, #tpu.memory_space<vmem>>, vector<2x128xf32>
      tpu.vector_store %arg6[%c0_9, %c0_10], %14 {strides = array<i32>} : memref<2x128xf32, #tpu.memory_space<vmem>>, vector<2x128xf32>,
      %c0_11 = arith.constant 0 : index
      %c0_12 = arith.constant 0 : index
      %17 = vector.load %arg7[%c0_11, %c0_12] : memref<2x128xf32, #tpu.memory_space<vmem>>, vector<2x128xf32>
      tpu.vector_store %arg7[%c0_11, %c0_12], %14 {strides = array<i32>} : memref<2x128xf32, #tpu.memory_space<vmem>>, vector<2x128xf32>,
      %c0_13 = arith.constant 0 : index
      %c0_14 = arith.constant 0 : index
      %18 = vector.load %arg8[%c0_13, %c0_14] : memref<2x128xf32, #tpu.memory_space<vmem>>, vector<2x128xf32>
      tpu.vector_store %arg8[%c0_13, %c0_14], %14 {strides = array<i32>} : memref<2x128xf32, #tpu.memory_space<vmem>>, vector<2x128xf32>,
      %c0_15 = arith.constant 0 : index
      %c0_16 = arith.constant 0 : index
      %19 = vector.load %arg9[%c0_15, %c0_16] : memref<2x128xf32, #tpu.memory_space<vmem>>, vector<2x128xf32>
      tpu.vector_store %arg9[%c0_15, %c0_16], %14 {strides = array<i32>} : memref<2x128xf32, #tpu.memory_space<vmem>>, vector<2x128xf32>,
    } else {
    }
    %c256_i32 = arith.constant 256 : i32
    %3 = arith.muli %arg1, %c256_i32 : i32
    %c256_i32_1 = arith.constant 256 : i32
    %4 = arith.subi %c256_i32_1, %3 : i32
    %c256_i32_2 = arith.constant 256 : i32
    %5 = arith.cmpi sge, %4, %c256_i32_2 : i32
    %6 = arith.extui %5 : i1 to i32
    %c0_i32_3 = arith.constant 0 : i32
    %7 = arith.cmpi ne, %6, %c0_i32_3 : i32
    scf.if %7 {
      %cst = arith.constant 0.000000e+00 : f32
      %14 = vector.broadcast %cst : f32 to vector<2x128xf32>
      %c0_i32_8 = arith.constant 0 : i32
      %c128_i32 = arith.constant 128 : i32
      %15 = arith.muli %c0_i32_8, %c128_i32 : i32
      %16 = tpu.assume_multiple %15, 128 : i32
      %c0 = arith.constant 0 : index
      %17 = arith.index_cast %16 : i32 to index
      %18 = vector.load %arg2[%c0, %17] : memref<2x256xf32, #tpu.memory_space<vmem>>, vector<2x128xf32>
      %c0_9 = arith.constant 0 : index
      %19 = arith.index_cast %16 : i32 to index
      %20 = vector.load %arg3[%c0_9, %19] : memref<2x256xf32, #tpu.memory_space<vmem>>, vector<2x128xf32>
      %21 = arith.addf %14, %18 : vector<2x128xf32>
      %22 = arith.addf %14, %20 : vector<2x128xf32>
      %23 = arith.mulf %18, %18 : vector<2x128xf32>
      %24 = arith.addf %14, %23 : vector<2x128xf32>
      %25 = arith.mulf %20, %20 : vector<2x128xf32>
      %26 = arith.addf %14, %25 : vector<2x128xf32>
      %27 = arith.mulf %18, %20 : vector<2x128xf32>
      %28 = arith.addf %14, %27 : vector<2x128xf32>
      %c1_i32 = arith.constant 1 : i32
      %c128_i32_10 = arith.constant 128 : i32
      %29 = arith.muli %c1_i32, %c128_i32_10 : i32
      %30 = tpu.assume_multiple %29, 128 : i32
      %c0_11 = arith.constant 0 : index
      %31 = arith.index_cast %30 : i32 to index
      %32 = vector.load %arg2[%c0_11, %31] : memref<2x256xf32, #tpu.memory_space<vmem>>, vector<2x128xf32>
      %c0_12 = arith.constant 0 : index
      %33 = arith.index_cast %30 : i32 to index
      %34 = vector.load %arg3[%c0_12, %33] : memref<2x256xf32, #tpu.memory_space<vmem>>, vector<2x128xf32>
      %35 = arith.addf %21, %32 : vector<2x128xf32>
      %36 = arith.addf %22, %34 : vector<2x128xf32>
      %37 = arith.mulf %32, %32 : vector<2x128xf32>
      %38 = arith.addf %24, %37 : vector<2x128xf32>
      %39 = arith.mulf %34, %34 : vector<2x128xf32>
      %40 = arith.addf %26, %39 : vector<2x128xf32>
      %41 = arith.mulf %32, %34 : vector<2x128xf32>
      %42 = arith.addf %28, %41 : vector<2x128xf32>
      %c2_i32 = arith.constant 2 : i32
      %c0_13 = arith.constant 0 : index
      %c0_14 = arith.constant 0 : index
      %43 = vector.load %arg5[%c0_13, %c0_14] : memref<2x128xf32, #tpu.memory_space<vmem>>, vector<2x128xf32>
      %44 = arith.addf %43, %35 : vector<2x128xf32>
      %c0_15 = arith.constant 0 : index
      %c0_16 = arith.constant 0 : index
      %45 = vector.load %arg5[%c0_15, %c0_16] : memref<2x128xf32, #tpu.memory_space<vmem>>, vector<2x128xf32>
      tpu.vector_store %arg5[%c0_15, %c0_16], %44 {strides = array<i32>} : memref<2x128xf32, #tpu.memory_space<vmem>>, vector<2x128xf32>,
      %c0_17 = arith.constant 0 : index
      %c0_18 = arith.constant 0 : index
      %46 = vector.load %arg6[%c0_17, %c0_18] : memref<2x128xf32, #tpu.memory_space<vmem>>, vector<2x128xf32>
      %47 = arith.addf %46, %36 : vector<2x128xf32>
      %c0_19 = arith.constant 0 : index
      %c0_20 = arith.constant 0 : index
      %48 = vector.load %arg6[%c0_19, %c0_20] : memref<2x128xf32, #tpu.memory_space<vmem>>, vector<2x128xf32>
      tpu.vector_store %arg6[%c0_19, %c0_20], %47 {strides = array<i32>} : memref<2x128xf32, #tpu.memory_space<vmem>>, vector<2x128xf32>,
      %c0_21 = arith.constant 0 : index
      %c0_22 = arith.constant 0 : index
      %49 = vector.load %arg7[%c0_21, %c0_22] : memref<2x128xf32, #tpu.memory_space<vmem>>, vector<2x128xf32>
      %50 = arith.addf %49, %38 : vector<2x128xf32>
      %c0_23 = arith.constant 0 : index
      %c0_24 = arith.constant 0 : index
      %51 = vector.load %arg7[%c0_23, %c0_24] : memref<2x128xf32, #tpu.memory_space<vmem>>, vector<2x128xf32>
      tpu.vector_store %arg7[%c0_23, %c0_24], %50 {strides = array<i32>} : memref<2x128xf32, #tpu.memory_space<vmem>>, vector<2x128xf32>,
      %c0_25 = arith.constant 0 : index
      %c0_26 = arith.constant 0 : index
      %52 = vector.load %arg8[%c0_25, %c0_26] : memref<2x128xf32, #tpu.memory_space<vmem>>, vector<2x128xf32>
      %53 = arith.addf %52, %40 : vector<2x128xf32>
      %c0_27 = arith.constant 0 : index
      %c0_28 = arith.constant 0 : index
      %54 = vector.load %arg8[%c0_27, %c0_28] : memref<2x128xf32, #tpu.memory_space<vmem>>, vector<2x128xf32>
      tpu.vector_store %arg8[%c0_27, %c0_28], %53 {strides = array<i32>} : memref<2x128xf32, #tpu.memory_space<vmem>>, vector<2x128xf32>,
      %c0_29 = arith.constant 0 : index
      %c0_30 = arith.constant 0 : index
      %55 = vector.load %arg9[%c0_29, %c0_30] : memref<2x128xf32, #tpu.memory_space<vmem>>, vector<2x128xf32>
      %56 = arith.addf %55, %42 : vector<2x128xf32>
      %c0_31 = arith.constant 0 : index
      %c0_32 = arith.constant 0 : index
      %57 = vector.load %arg9[%c0_31, %c0_32] : memref<2x128xf32, #tpu.memory_space<vmem>>, vector<2x128xf32>
      tpu.vector_store %arg9[%c0_31, %c0_32], %56 {strides = array<i32>} : memref<2x128xf32, #tpu.memory_space<vmem>>, vector<2x128xf32>,
    } else {
    }
    %c256_i32_4 = arith.constant 256 : i32
    %8 = arith.cmpi slt, %4, %c256_i32_4 : i32
    %9 = arith.extui %8 : i1 to i32
    %c0_i32_5 = arith.constant 0 : i32
    %10 = arith.cmpi ne, %9, %c0_i32_5 : i32
    scf.if %10 {
      %14 = tpu.iota {dimensions = array<i32: 1>} : vector<2x128xi32>
      %cst = arith.constant 0.000000e+00 : f32
      %15 = vector.broadcast %cst : f32 to vector<2x128xf32>
      %c0_i32_8 = arith.constant 0 : i32
      %c128_i32 = arith.constant 128 : i32
      %16 = arith.muli %c0_i32_8, %c128_i32 : i32
      %17 = tpu.assume_multiple %16, 128 : i32
      %c128_i32_9 = arith.constant 128 : i32
      %18 = arith.muli %c0_i32_8, %c128_i32_9 : i32
      %19 = arith.subi %4, %18 : i32
      %20 = vector.broadcast %19 : i32 to vector<2x128xi32>
      %21 = arith.cmpi slt, %14, %20 : vector<2x128xi32>
      %c0 = arith.constant 0 : index
      %22 = arith.index_cast %17 : i32 to index
      %23 = vector.load %arg2[%c0, %22] : memref<2x256xf32, #tpu.memory_space<vmem>>, vector<2x128xf32>
      %cst_10 = arith.constant 0.000000e+00 : f32
      %24 = vector.broadcast %cst_10 : f32 to vector<2x128xf32>
      %25 = arith.select %21, %23, %24 : vector<2x128xi1>, vector<2x128xf32>
      %c0_11 = arith.constant 0 : index
      %26 = arith.index_cast %17 : i32 to index
      %27 = vector.load %arg3[%c0_11, %26] : memref<2x256xf32, #tpu.memory_space<vmem>>, vector<2x128xf32>
      %cst_12 = arith.constant 0.000000e+00 : f32
      %28 = vector.broadcast %cst_12 : f32 to vector<2x128xf32>
      %29 = arith.select %21, %27, %28 : vector<2x128xi1>, vector<2x128xf32>
      %30 = arith.addf %15, %25 : vector<2x128xf32>
      %31 = arith.addf %15, %29 : vector<2x128xf32>
      %32 = arith.mulf %25, %25 : vector<2x128xf32>
      %33 = arith.addf %15, %32 : vector<2x128xf32>
      %34 = arith.mulf %29, %29 : vector<2x128xf32>
      %35 = arith.addf %15, %34 : vector<2x128xf32>
      %36 = arith.mulf %25, %29 : vector<2x128xf32>
      %37 = arith.addf %15, %36 : vector<2x128xf32>
      %c1_i32 = arith.constant 1 : i32
      %c128_i32_13 = arith.constant 128 : i32
      %38 = arith.muli %c1_i32, %c128_i32_13 : i32
      %39 = tpu.assume_multiple %38, 128 : i32
      %c128_i32_14 = arith.constant 128 : i32
      %40 = arith.muli %c1_i32, %c128_i32_14 : i32
      %41 = arith.subi %4, %40 : i32
      %42 = vector.broadcast %41 : i32 to vector<2x128xi32>
      %43 = arith.cmpi slt, %14, %42 : vector<2x128xi32>
      %c0_15 = arith.constant 0 : index
      %44 = arith.index_cast %39 : i32 to index
      %45 = vector.load %arg2[%c0_15, %44] : memref<2x256xf32, #tpu.memory_space<vmem>>, vector<2x128xf32>
      %cst_16 = arith.constant 0.000000e+00 : f32
      %46 = vector.broadcast %cst_16 : f32 to vector<2x128xf32>
      %47 = arith.select %43, %45, %46 : vector<2x128xi1>, vector<2x128xf32>
      %c0_17 = arith.constant 0 : index
      %48 = arith.index_cast %39 : i32 to index
      %49 = vector.load %arg3[%c0_17, %48] : memref<2x256xf32, #tpu.memory_space<vmem>>, vector<2x128xf32>
      %cst_18 = arith.constant 0.000000e+00 : f32
      %50 = vector.broadcast %cst_18 : f32 to vector<2x128xf32>
      %51 = arith.select %43, %49, %50 : vector<2x128xi1>, vector<2x128xf32>
      %52 = arith.addf %30, %47 : vector<2x128xf32>
      %53 = arith.addf %31, %51 : vector<2x128xf32>
      %54 = arith.mulf %47, %47 : vector<2x128xf32>
      %55 = arith.addf %33, %54 : vector<2x128xf32>
      %56 = arith.mulf %51, %51 : vector<2x128xf32>
      %57 = arith.addf %35, %56 : vector<2x128xf32>
      %58 = arith.mulf %47, %51 : vector<2x128xf32>
      %59 = arith.addf %37, %58 : vector<2x128xf32>
      %c2_i32 = arith.constant 2 : i32
      %c0_19 = arith.constant 0 : index
      %c0_20 = arith.constant 0 : index
      %60 = vector.load %arg5[%c0_19, %c0_20] : memref<2x128xf32, #tpu.memory_space<vmem>>, vector<2x128xf32>
      %61 = arith.addf %60, %52 : vector<2x128xf32>
      %c0_21 = arith.constant 0 : index
      %c0_22 = arith.constant 0 : index
      %62 = vector.load %arg5[%c0_21, %c0_22] : memref<2x128xf32, #tpu.memory_space<vmem>>, vector<2x128xf32>
      tpu.vector_store %arg5[%c0_21, %c0_22], %61 {strides = array<i32>} : memref<2x128xf32, #tpu.memory_space<vmem>>, vector<2x128xf32>,
      %c0_23 = arith.constant 0 : index
      %c0_24 = arith.constant 0 : index
      %63 = vector.load %arg6[%c0_23, %c0_24] : memref<2x128xf32, #tpu.memory_space<vmem>>, vector<2x128xf32>
      %64 = arith.addf %63, %53 : vector<2x128xf32>
      %c0_25 = arith.constant 0 : index
      %c0_26 = arith.constant 0 : index
      %65 = vector.load %arg6[%c0_25, %c0_26] : memref<2x128xf32, #tpu.memory_space<vmem>>, vector<2x128xf32>
      tpu.vector_store %arg6[%c0_25, %c0_26], %64 {strides = array<i32>} : memref<2x128xf32, #tpu.memory_space<vmem>>, vector<2x128xf32>,
      %c0_27 = arith.constant 0 : index
      %c0_28 = arith.constant 0 : index
      %66 = vector.load %arg7[%c0_27, %c0_28] : memref<2x128xf32, #tpu.memory_space<vmem>>, vector<2x128xf32>
      %67 = arith.addf %66, %55 : vector<2x128xf32>
      %c0_29 = arith.constant 0 : index
      %c0_30 = arith.constant 0 : index
      %68 = vector.load %arg7[%c0_29, %c0_30] : memref<2x128xf32, #tpu.memory_space<vmem>>, vector<2x128xf32>
      tpu.vector_store %arg7[%c0_29, %c0_30], %67 {strides = array<i32>} : memref<2x128xf32, #tpu.memory_space<vmem>>, vector<2x128xf32>,
      %c0_31 = arith.constant 0 : index
      %c0_32 = arith.constant 0 : index
      %69 = vector.load %arg8[%c0_31, %c0_32] : memref<2x128xf32, #tpu.memory_space<vmem>>, vector<2x128xf32>
      %70 = arith.addf %69, %57 : vector<2x128xf32>
      %c0_33 = arith.constant 0 : index
      %c0_34 = arith.constant 0 : index
      %71 = vector.load %arg8[%c0_33, %c0_34] : memref<2x128xf32, #tpu.memory_space<vmem>>, vector<2x128xf32>
      tpu.vector_store %arg8[%c0_33, %c0_34], %70 {strides = array<i32>} : memref<2x128xf32, #tpu.memory_space<vmem>>, vector<2x128xf32>,
      %c0_35 = arith.constant 0 : index
      %c0_36 = arith.constant 0 : index
      %72 = vector.load %arg9[%c0_35, %c0_36] : memref<2x128xf32, #tpu.memory_space<vmem>>, vector<2x128xf32>
      %73 = arith.addf %72, %59 : vector<2x128xf32>
      %c0_37 = arith.constant 0 : index
      %c0_38 = arith.constant 0 : index
      %74 = vector.load %arg9[%c0_37, %c0_38] : memref<2x128xf32, #tpu.memory_space<vmem>>, vector<2x128xf32>
      tpu.vector_store %arg9[%c0_37, %c0_38], %73 {strides = array<i32>} : memref<2x128xf32, #tpu.memory_space<vmem>>, vector<2x128xf32>,
    } else {
    }
    %c0_i32_6 = arith.constant 0 : i32
    %11 = arith.cmpi eq, %arg1, %c0_i32_6 : i32
    %12 = arith.extui %11 : i1 to i32
    %c0_i32_7 = arith.constant 0 : i32
    %13 = arith.cmpi ne, %12, %c0_i32_7 : i32
    scf.if %13 {
      %c0 = arith.constant 0 : index
      %c0_8 = arith.constant 0 : index
      %14 = vector.load %arg5[%c0, %c0_8] : memref<2x128xf32, #tpu.memory_space<vmem>>, vector<2x128xf32>
      %cst = arith.constant dense<0.000000e+00> : vector<2xf32>
      %15 = vector.multi_reduction <add>, %14, %cst [1] : vector<2x128xf32> to vector<2xf32>
      %16 = vector.shape_cast %15 : vector<2xf32> to vector<2x1xf32>
      %c0_9 = arith.constant 0 : index
      %c0_10 = arith.constant 0 : index
      %17 = vector.load %arg6[%c0_9, %c0_10] : memref<2x128xf32, #tpu.memory_space<vmem>>, vector<2x128xf32>
      %cst_11 = arith.constant dense<0.000000e+00> : vector<2xf32>
      %18 = vector.multi_reduction <add>, %17, %cst_11 [1] : vector<2x128xf32> to vector<2xf32>
      %19 = vector.shape_cast %18 : vector<2xf32> to vector<2x1xf32>
      %c0_12 = arith.constant 0 : index
      %c0_13 = arith.constant 0 : index
      %20 = vector.load %arg7[%c0_12, %c0_13] : memref<2x128xf32, #tpu.memory_space<vmem>>, vector<2x128xf32>
      %cst_14 = arith.constant dense<0.000000e+00> : vector<2xf32>
      %21 = vector.multi_reduction <add>, %20, %cst_14 [1] : vector<2x128xf32> to vector<2xf32>
      %22 = vector.shape_cast %21 : vector<2xf32> to vector<2x1xf32>
      %c0_15 = arith.constant 0 : index
      %c0_16 = arith.constant 0 : index
      %23 = vector.load %arg8[%c0_15, %c0_16] : memref<2x128xf32, #tpu.memory_space<vmem>>, vector<2x128xf32>
      %cst_17 = arith.constant dense<0.000000e+00> : vector<2xf32>
      %24 = vector.multi_reduction <add>, %23, %cst_17 [1] : vector<2x128xf32> to vector<2xf32>
      %25 = vector.shape_cast %24 : vector<2xf32> to vector<2x1xf32>
      %c0_18 = arith.constant 0 : index
      %c0_19 = arith.constant 0 : index
      %26 = vector.load %arg9[%c0_18, %c0_19] : memref<2x128xf32, #tpu.memory_space<vmem>>, vector<2x128xf32>
      %cst_20 = arith.constant dense<0.000000e+00> : vector<2xf32>
      %27 = vector.multi_reduction <add>, %26, %cst_20 [1] : vector<2x128xf32> to vector<2xf32>
      %28 = vector.shape_cast %27 : vector<2xf32> to vector<2x1xf32>
      %29 = arith.mulf %16, %19 : vector<2x1xf32>
      %cst_21 = arith.constant 3.906250e-03 : f32
      %30 = vector.broadcast %cst_21 : f32 to vector<2x1xf32>
      %31 = arith.mulf %29, %30 : vector<2x1xf32>
      %32 = arith.subf %28, %31 : vector<2x1xf32>
      %33 = arith.mulf %16, %16 : vector<2x1xf32>
      %cst_22 = arith.constant 3.906250e-03 : f32
      %34 = vector.broadcast %cst_22 : f32 to vector<2x1xf32>
      %35 = arith.mulf %33, %34 : vector<2x1xf32>
      %36 = arith.subf %22, %35 : vector<2x1xf32>
      %cst_23 = arith.constant 0.000000e+00 : f32
      %37 = vector.broadcast %cst_23 : f32 to vector<2x1xf32>
      %38 = arith.maximumf %36, %37 : vector<2x1xf32>
      %39 = arith.mulf %19, %19 : vector<2x1xf32>
      %cst_24 = arith.constant 3.906250e-03 : f32
      %40 = vector.broadcast %cst_24 : f32 to vector<2x1xf32>
      %41 = arith.mulf %39, %40 : vector<2x1xf32>
      %42 = arith.subf %25, %41 : vector<2x1xf32>
      %cst_25 = arith.constant 0.000000e+00 : f32
      %43 = vector.broadcast %cst_25 : f32 to vector<2x1xf32>
      %44 = arith.maximumf %42, %43 : vector<2x1xf32>
      %45 = arith.mulf %38, %44 : vector<2x1xf32>
      %46 = math.sqrt %45 : vector<2x1xf32>
      %cst_26 = arith.constant 9.99999993E-9 : f32
      %47 = vector.broadcast %cst_26 : f32 to vector<2x1xf32>
      %48 = arith.addf %46, %47 : vector<2x1xf32>
      %49 = arith.divf %32, %48 : vector<2x1xf32>
      %cst_27 = arith.constant 1.000000e+00 : f32
      %50 = vector.broadcast %cst_27 : f32 to vector<2x1xf32>
      %51 = arith.subf %50, %49 : vector<2x1xf32>
      %c0_28 = arith.constant 0 : index
      %c0_29 = arith.constant 0 : index
      %52 = vector.load %arg4[%c0_28, %c0_29] : memref<2x1xf32, #tpu.memory_space<vmem>>, vector<2x1xf32>
      tpu.vector_store %arg4[%c0_28, %c0_29], %51 {strides = array<i32>} : memref<2x1xf32, #tpu.memory_space<vmem>>, vector<2x1xf32>,
    } else {
    }
    return
  }
  func.func @transform_0(%arg0: i32, %arg1: i32) -> (i32, i32) {
    %c0_i32 = arith.constant 0 : i32
    return %arg0, %arg1 : i32, i32
  }
  func.func @transform_1(%arg0: i32, %arg1: i32) -> (i32, i32) {
    %c0_i32 = arith.constant 0 : i32
    return %arg0, %arg1 : i32, i32
  }
  func.func @transform_2(%arg0: i32, %arg1: i32) -> (i32, i32) {
    %c0_i32 = arith.constant 0 : i32
    %c0_i32_0 = arith.constant 0 : i32
    return %arg0, %c0_i32 : i32, i32
  }
}

</mosaic_0001>

<llo_original>
// kernel: tpu_custom_call.1
$region0: #{tpu_custom_call.1}
  #allocation0 [shape = 'u32[]', space=smem, size = 0x4, offset = 0x4, fixed_abs, tag = 'smem constant byte address 0x4 - core index']
  #allocation1 [shape = 'u32[144,128]{1,0:T(1,128)}', space=vmem, size = 0x12000, scoped, tag = 'internal scratch']
  #allocation2 [shape = 'f32[2,128]{1,0:T(2,128)}', space=vmem, size = 0x400, scoped, tag = 'scratch operand']
  #allocation3 [shape = 'f32[2,128]{1,0:T(2,128)}', space=vmem, size = 0x400, scoped, tag = 'scratch operand']
  #allocation4 [shape = 'f32[2,128]{1,0:T(2,128)}', space=vmem, size = 0x400, scoped, tag = 'scratch operand']
  #allocation5 [shape = 'f32[2,128]{1,0:T(2,128)}', space=vmem, size = 0x400, scoped, tag = 'scratch operand']
  #allocation6 [shape = 'f32[2,128]{1,0:T(2,128)}', space=vmem, size = 0x400, scoped, tag = 'scratch operand']
  %s0 = inlined_call_operand.hbm [shape: f32[2,256], index: 0, kind: input, shape index: {}]
  %s1 = inlined_call_operand.hbm [shape: f32[2,256], index: 1, kind: input, shape index: {}]
  %s2 = inlined_call_operand.vmem [shape: f32[2,1], index: 2, kind: output, shape index: {}]
  %s3 = sld [smem:[#allocation0]]
  $region42: #{tpu_custom_call.1} parent=0
    _
  %s5 = ssub.s32 1, %s3
  %s6 = scalar_select 0, %s5, %s3
  $region1: #{tpu_custom_call.1} parent=0
    #allocation7 [shape = 'u8[2048]{0}', space=vmem, size = 0x800, scoped, tag = 'input window, operand 0, single buffered']
    #allocation8 [shape = 's32[1]{0}', space=sflag, size = 0x4, scoped, tag = 'scoped memory for tpu_custom_call.1']
    #allocation9 [shape = 'u8[2048]{0}', space=vmem, size = 0x800, scoped, tag = 'input window, operand 1, single buffered']
    #allocation10 [shape = 's32[1]{0}', space=sflag, size = 0x4, scoped, tag = 'scoped memory for tpu_custom_call.1']
    %7 = vsyncpa [#allocation8], 0
    %8 = vsyncpa [#allocation10], 0
    // Predicated region
    $region2: #{tpu_custom_call.1} parent=1 // pred_check
      _
    $region3: #{tpu_custom_call.1} parent=1 // pred_check_branch
      %10 = sbr.rel (0) target = $region5
    $region4: #{tpu_custom_call.1} parent=1 // pred_region
      %s12 = ssub.s32 64, 64
      %13 = vsyncadd [#allocation8], %s12
      %s15 = sshll.u32 [#allocation7], 4
      %s16 = int_to_ptr.vmem [resolvable:$true] %s15
      %18 = dma.hbm_to_vmem [thread:$0]  %s0, 64, %s16, [#allocation8]
    $region5: #{tpu_custom_call.1} parent=1 // pred_fallthru
      _
    // Predicated region
    $region6: #{tpu_custom_call.1} parent=1 // pred_check
      _
    $region7: #{tpu_custom_call.1} parent=1 // pred_check_branch
      %20 = sbr.rel (0) target = $region9
    $region8: #{tpu_custom_call.1} parent=1 // pred_region
      %s22 = ssub.s32 64, 64
      %23 = vsyncadd [#allocation10], %s22
      %s25 = sshll.u32 [#allocation9], 4
      %s26 = int_to_ptr.vmem [resolvable:$true] %s25
      %28 = dma.hbm_to_vmem [thread:$0]  %s1, 64, %s26, [#allocation10]
    $region9: #{tpu_custom_call.1} parent=1 // pred_fallthru
      _
    // Predicated region
    $region10: #{tpu_custom_call.1} parent=1 // pred_check
      _
    $region11: #{tpu_custom_call.1} parent=1 // pred_check_branch
      %30 = sbr.rel (0) target = $region13
    $region12: #{tpu_custom_call.1} parent=1 // pred_region
      %31 = dma.done [#allocation8], 64
    $region13: #{tpu_custom_call.1} parent=1 // pred_fallthru
      _
    // Predicated region
    $region14: #{tpu_custom_call.1} parent=1 // pred_check
      _
    $region15: #{tpu_custom_call.1} parent=1 // pred_check_branch
      %33 = sbr.rel (0) target = $region17
    $region16: #{tpu_custom_call.1} parent=1 // pred_region
      %34 = dma.done [#allocation10], 64
    $region17: #{tpu_custom_call.1} parent=1 // pred_fallthru
      _
    %p35 = scmp.eq.s32.totalorder 0, 0
    // Predicated region
    $region18: #{tpu_custom_call.1} parent=1 // pred_check
      %p36 = pneg %p35
    $region19: #{tpu_custom_call.1} parent=1 // pred_check_branch
      %38 = sbr.rel (%p36) target = $region21
    $region20: #{tpu_custom_call.1} parent=1 // pred_region
      %39 = vst [vmem:[#allocation2] sm:$0x3] 0.0
      %40 = vst [vmem:[#allocation3] sm:$0x3] 0.0
      %41 = vst [vmem:[#allocation4] sm:$0x3] 0.0
      %42 = vst [vmem:[#allocation5] sm:$0x3] 0.0
      %43 = vst [vmem:[#allocation6] sm:$0x3] 0.0
    $region21: #{tpu_custom_call.1} parent=1 // pred_fallthru
      _
    %s44 = smul.u32 0, 256
    %s45 = ssub.s32 256, %s44
    %p46 = scmp.ge.s32.totalorder %s45, 256
    // Predicated region
    $region22: #{tpu_custom_call.1} parent=1 // pred_check
      %p47 = pneg %p46
    $region23: #{tpu_custom_call.1} parent=1 // pred_check_branch
      %49 = sbr.rel (%p47) target = $region25
    $region24: #{tpu_custom_call.1} parent=1 // pred_region
      %v50 = vld [vmem:[#allocation7] sm:$0x3]
      %v51 = vld [vmem:[#allocation9] sm:$0x3]
      %v52 = vadd.f32 %v50, 0.0
      %v53 = vadd.f32 %v51, 0.0
      %v54 = vmul.f32 %v50, %v50
      %v55 = vadd.f32 %v54, 0.0
      %v56 = vmul.f32 %v51, %v51
      %v57 = vadd.f32 %v56, 0.0
      %v58 = vmul.f32 %v50, %v51
      %v59 = vadd.f32 %v58, 0.0
      %s60 = scalar_lea.vmem [#allocation7], 2
      %v61 = vld [vmem:[%s60] sm:$0x3]
      %s62 = scalar_lea.vmem [#allocation9], 2
      %v63 = vld [vmem:[%s62] sm:$0x3]
      %v64 = vadd.f32 %v52, %v61
      %v65 = vadd.f32 %v53, %v63
      %v66 = vmul.f32 %v61, %v61
      %v67 = vadd.f32 %v55, %v66
      %v68 = vmul.f32 %v63, %v63
      %v69 = vadd.f32 %v57, %v68
      %v70 = vmul.f32 %v61, %v63
      %v71 = vadd.f32 %v59, %v70
      %v72 = vld [vmem:[#allocation2] sm:$0x3]
      %v73 = vadd.f32 %v72, %v64
      %74 = vst [vmem:[#allocation2] sm:$0x3] %v73
      %v75 = vld [vmem:[#allocation3] sm:$0x3]
      %v76 = vadd.f32 %v75, %v65
      %77 = vst [vmem:[#allocation3] sm:$0x3] %v76
      %v78 = vld [vmem:[#allocation4] sm:$0x3]
      %v79 = vadd.f32 %v78, %v67
      %80 = vst [vmem:[#allocation4] sm:$0x3] %v79
      %v81 = vld [vmem:[#allocation5] sm:$0x3]
      %v82 = vadd.f32 %v81, %v69
      %83 = vst [vmem:[#allocation5] sm:$0x3] %v82
      %v84 = vld [vmem:[#allocation6] sm:$0x3]
      %v85 = vadd.f32 %v84, %v71
      %86 = vst [vmem:[#allocation6] sm:$0x3] %v85
    $region25: #{tpu_custom_call.1} parent=1 // pred_fallthru
      _
    %p87 = scmp.lt.s32.totalorder %s45, 256
    // Predicated region
    $region26: #{tpu_custom_call.1} parent=1 // pred_check
      %p88 = pneg %p87
    $region27: #{tpu_custom_call.1} parent=1 // pred_check_branch
      %90 = sbr.rel (%p88) target = $region29
    $region28: #{tpu_custom_call.1} parent=1 // pred_region
      %v91 = vlaneseq
      %v92 = vand.u32 %v91, 127
      %v93 = vstv %s45
      %vm94 = vcmp.lt.s32.totalorder %v92, %v93
      %v95 = vld [vmem:[#allocation7] sm:$0x3]
      %v96 = vsel %vm94, %v95, 0.0
      %v97 = vld [vmem:[#allocation9] sm:$0x3]
      %v98 = vsel %vm94, %v97, 0.0
      %v99 = vadd.f32 %v96, 0.0
      %v100 = vadd.f32 %v98, 0.0
      %v101 = vmul.f32 %v96, %v96
      %v102 = vadd.f32 %v101, 0.0
      %v103 = vmul.f32 %v98, %v98
      %v104 = vadd.f32 %v103, 0.0
      %v105 = vmul.f32 %v96, %v98
      %v106 = vadd.f32 %v105, 0.0
      %s107 = ssub.s32 128, %s44
      %v108 = vstv %s107
      %vm109 = vcmp.lt.s32.totalorder %v92, %v108
      %s110 = scalar_lea.vmem [#allocation7], 2
      %v111 = vld [vmem:[%s110] sm:$0x3]
      %v112 = vsel %vm109, %v111, 0.0
      %s113 = scalar_lea.vmem [#allocation9], 2
      %v114 = vld [vmem:[%s113] sm:$0x3]
      %v115 = vsel %vm109, %v114, 0.0
      %v116 = vadd.f32 %v99, %v112
      %v117 = vadd.f32 %v100, %v115
      %v118 = vmul.f32 %v112, %v112
      %v119 = vadd.f32 %v102, %v118
      %v120 = vmul.f32 %v115, %v115
      %v121 = vadd.f32 %v104, %v120
      %v122 = vmul.f32 %v112, %v115
      %v123 = vadd.f32 %v106, %v122
      %v124 = vld [vmem:[#allocation2] sm:$0x3]
      %v125 = vadd.f32 %v124, %v116
      %126 = vst [vmem:[#allocation2] sm:$0x3] %v125
      %v127 = vld [vmem:[#allocation3] sm:$0x3]
      %v128 = vadd.f32 %v127, %v117
      %129 = vst [vmem:[#allocation3] sm:$0x3] %v128
      %v130 = vld [vmem:[#allocation4] sm:$0x3]
      %v131 = vadd.f32 %v130, %v119
      %132 = vst [vmem:[#allocation4] sm:$0x3] %v131
      %v133 = vld [vmem:[#allocation5] sm:$0x3]
      %v134 = vadd.f32 %v133, %v121
      %135 = vst [vmem:[#allocation5] sm:$0x3] %v134
      %v136 = vld [vmem:[#allocation6] sm:$0x3]
      %v137 = vadd.f32 %v136, %v123
      %138 = vst [vmem:[#allocation6] sm:$0x3] %v137
    $region29: #{tpu_custom_call.1} parent=1 // pred_fallthru
      _
    // Predicated region
    $region30: #{tpu_custom_call.1} parent=1 // pred_check
      %p139 = pneg %p35
    $region31: #{tpu_custom_call.1} parent=1 // pred_check_branch
      %141 = sbr.rel (%p139) target = $region33
    $region32: #{tpu_custom_call.1} parent=1 // pred_region
      %v142 = vld [vmem:[#allocation2] sm:$0x3]
      %vm143 = vcmask 1041408
      %v144 = vsel %vm143, %v142, 0.0
      %145 = vadd.xlane.f32.xlu0 %v144
      %v146 = vpop.xlane.xlu0 %145
      %v147 = vld [vmem:[#allocation3] sm:$0x3]
      %v148 = vsel %vm143, %v147, 0.0
      %149 = vadd.xlane.f32.xlu0 %v148
      %v150 = vpop.xlane.xlu0 %149
      %v151 = vld [vmem:[#allocation4] sm:$0x3]
      %v152 = vsel %vm143, %v151, 0.0
      %153 = vadd.xlane.f32.xlu0 %v152
      %v154 = vpop.xlane.xlu0 %153
      %v155 = vld [vmem:[#allocation5] sm:$0x3]
      %v156 = vsel %vm143, %v155, 0.0
      %157 = vadd.xlane.f32.xlu0 %v156
      %v158 = vpop.xlane.xlu0 %157
      %v159 = vld [vmem:[#allocation6] sm:$0x3]
      %v160 = vsel %vm143, %v159, 0.0
      %161 = vadd.xlane.f32.xlu0 %v160
      %v162 = vpop.xlane.xlu0 %161
      %v163 = vmul.f32 %v146, %v150
      %v164 = vmul.f32 %v163, 0.00390625
      %v165 = vsub.f32 %v162, %v164
      %v166 = vmul.f32 %v146, %v146
      %v167 = vmul.f32 %v166, 0.00390625
      %v168 = vsub.f32 %v154, %v167
      %v169 = vmax.f32 %v168, 0.0
      %v170 = vmul.f32 %v150, %v150
      %v171 = vmul.f32 %v170, 0.00390625
      %v172 = vsub.f32 %v158, %v171
      %v173 = vmax.f32 %v172, 0.0
      %v174 = vmul.f32 %v169, %v173
      %v175 = vrsqrt.pop %v174
      %v176 = vmul.f32 %v174, %v175
      %vm177 = vcmp.eq.f32.partialorder %v174, inf
      %v178 = vsel %vm177, %v174, %v176
      %vm179 = vcmp.eq.f32.partialorder %v174, 0.0
      %v180 = vand.u32 %v174, 2147483648
      %v181 = vsel %vm179, %v180, %v178
      %v182 = vadd.f32 %v181, 1e-08
      %v183 = vrcp.pop %v182
      %v184 = vmul.f32 %v165, %v183
      %v185 = vsub.f32 1.0, %v184
      %vm186 = vcmask 1024
      %187 = vst.msk [vmem:[%s2] sm:$0x3] %vm186, %v185
    $region33: #{tpu_custom_call.1} parent=1 // pred_fallthru
      _
    // Predicated region
    $region34: #{tpu_custom_call.1} parent=1 // pred_check
      _
    $region35: #{tpu_custom_call.1} parent=1 // pred_check_branch
      %189 = sbr.rel (0) target = $region37
    $region36: #{tpu_custom_call.1} parent=1 // pred_region
      _
    $region37: #{tpu_custom_call.1} parent=1 // pred_fallthru
      _
    // Predicated region
    $region38: #{tpu_custom_call.1} parent=1 // pred_check
      _
    $region39: #{tpu_custom_call.1} parent=1 // pred_check_branch
      %191 = sbr.rel (0) target = $region41
    $region40: #{tpu_custom_call.1} parent=1 // pred_region
      _
    $region41: #{tpu_custom_call.1} parent=1 // pred_fallthru
      _
    %192 = vsyncpa [#allocation8], 1
    %193 = vsyncpa [#allocation10], 1

</llo_original>
